<compile_context>
chip_gen: v7x
topology: tpu7x:2x2x1
jax: 0.10.0
libtpu: 0.0.40
codegen_flags: <defaults>
</compile_context>

<pallas_src>
import functools

import jax
import jax.numpy as jnp
from jax.experimental import pallas as pl
from jax.experimental.pallas import tpu as pltpu

EPS = 1e-5                       # nn.BatchNorm2d default eps
_VMEM_LIMIT = 48 * 1024 * 1024   # safe on v5e/v6e (128 MiB) and v7x (64 MiB)


def _round_up(x, m):
    return -(-x // m) * m


def _pick_tiling(m):
    """Generic M tiling: multiple of 16 (bf16 sublanes), capped at 512, and
    >= 2 tiles when possible so both v7x TensorCores get work."""
    tm = max(16, min(512, _round_up(-(-m // 2), 16)))
    return tm, _round_up(m, tm)


def _pad_k(k):
    # K is the LHS lane axis / RHS sublane axis: 128-align it when large.
    return _round_up(k, 128) if k >= 128 else _round_up(k, 16)


def _valid_mask(hp, wp, rows_pad):
    """1.0 at valid output positions of the (hp, wp) padded grid, else 0."""
    yy = jnp.arange(hp)[:, None]
    xx = jnp.arange(wp)[None, :]
    valid = (yy >= 1) & (yy <= hp - 2) & (xx >= 1) & (xx <= wp - 2)
    mask = valid.astype(jnp.float32).reshape(hp * wp)
    return jnp.pad(mask, (0, rows_pad - hp * wp))[:, None]      # (rows_pad, 1)


def _fold_bn(stats, m_valid, gamma, beta, c_pad):
    """Combine per-tile partial sums into folded BN scale/shift (f32)."""
    ssum = jnp.sum(stats[:, 0, :], axis=0)
    ssq = jnp.sum(stats[:, 1, :], axis=0)
    mean = ssum / m_valid
    var = jnp.maximum(ssq / m_valid - mean * mean, 0.0)   # biased batch var
    g = jnp.pad(gamma, (0, c_pad - gamma.shape[0]))
    b = jnp.pad(beta, (0, c_pad - beta.shape[0]))
    scale = g * jax.lax.rsqrt(var + EPS)
    shift = b - mean * scale
    return scale[None, :].astype(jnp.float32), shift[None, :].astype(jnp.float32)


# ---------------------------------------------------------------------------
# Kernel 1: fused stride-1 3x3 conv (tap-streaming) + masked BN partial sums
# ---------------------------------------------------------------------------
def _fused_conv3x3_kernel(x_ref, w_ref, mask_ref, y_ref, stats_ref, acc_ref,
                          *, wp):
    rows = acc_ref.shape[0]
    # 9-tap conv-as-matmul: each tap is a constant-offset 2-D window of the
    # flat per-image slab (already in VMEM via the BlockSpec pipeline).
    for t in range(9):
        off = (t // 3) * wp + (t % 3)
        lhs = x_ref[0, pl.ds(off, rows), :]
        prod = jnp.dot(lhs, w_ref[t], preferred_element_type=jnp.float32)
        if t == 0:
            acc_ref[...] = prod
        else:
            acc_ref[...] += prod
    # bf16 activation + masked per-image BN partials.  Stats are taken from
    # the bf16-rounded values so scale/shift match what the epilogue applies.
    yq = acc_ref[...].astype(jnp.bfloat16)
    y_ref[...] = yq
    yf = yq.astype(jnp.float32) * mask_ref[...]
    stats_ref[0, 0:1, :] = jnp.sum(yf, axis=0, keepdims=True)
    stats_ref[0, 1:2, :] = jnp.sum(yf * yf, axis=0, keepdims=True)


def conv3x3_s1_fused(xp_img, w9, gamma, beta):
    """Stride-1 3x3 conv + BN batch stats.

    xp_img: (N, Hp, Wp, Cin) bf16 halo-padded input (halo must be zeros).
    w9:     (9, Cin, Cout) f32 taps ordered (dy*3+dx, cin, cout).
    Returns y of shape (N*rows_pad, c_pad) bf16 in padded-flat layout
    (rows_pad = round_up(Hp*Wp, 8) rows per image) and the folded (scale,
    shift), both (1, c_pad) f32."""
    n_img, hp, wp, cin = xp_img.shape
    ho, wo = hp - 2, wp - 2
    cout = w9.shape[-1]
    c_pad = _round_up(cout, 128)          # lane-dense output stores
    rows = _round_up(hp * wp, 8)
    flat_len = rows + 2 * (wp + 1)
    # Flat slab with a (wp+1) zero guard on both ends: tap (dy, dx) becomes a
    # constant row offset dy*wp+dx -- no im2col buffer, no 9x HBM re-read.
    xpf = jnp.pad(xp_img.reshape(n_img, hp * wp, cin),
                  ((0, 0), (wp + 1, flat_len - (wp + 1) - hp * wp), (0, 0)))
    w = jnp.pad(w9, ((0, 0), (0, 0), (0, c_pad - cout))).astype(jnp.bfloat16)
    mask = _valid_mask(hp, wp, rows)

    y, stats = pl.pallas_call(
        functools.partial(_fused_conv3x3_kernel, wp=wp),
        out_shape=(jax.ShapeDtypeStruct((n_img * rows, c_pad), jnp.bfloat16),
                   jax.ShapeDtypeStruct((n_img, 8, c_pad), jnp.float32)),
        grid=(n_img,),
        in_specs=[pl.BlockSpec((1, flat_len, cin), lambda i: (i, 0, 0)),
                  pl.BlockSpec((9, cin, c_pad), lambda i: (0, 0, 0)),
                  pl.BlockSpec((rows, 1), lambda i: (0, 0))],
        out_specs=(pl.BlockSpec((rows, c_pad), lambda i: (i, 0)),
                   pl.BlockSpec((1, 8, c_pad), lambda i: (i, 0, 0))),
        scratch_shapes=[pltpu.VMEM((rows, c_pad), jnp.float32)],
        compiler_params=pltpu.CompilerParams(
            dimension_semantics=("parallel",),
            vmem_limit_bytes=_VMEM_LIMIT),
    )(xpf, w, mask)
    scale, shift = _fold_bn(stats, n_img * ho * wo, gamma, beta, c_pad)
    return y, scale, shift


# ---------------------------------------------------------------------------
# Kernel 2: generic M-tiled bf16 matmul + masked BN partial sums
# (used by the strided-conv1 fallback and the 1x1 projection shortcut)
# ---------------------------------------------------------------------------
def _matmul_stats_kernel(p_ref, w_ref, mask_ref, y_ref, stats_ref):
    y = jnp.dot(p_ref[...], w_ref[...], preferred_element_type=jnp.float32)
    yq = y.astype(jnp.bfloat16)
    y_ref[...] = yq
    yf = yq.astype(jnp.float32) * mask_ref[...]
    stats_ref[0, 0:1, :] = jnp.sum(yf, axis=0, keepdims=True)
    stats_ref[0, 1:2, :] = jnp.sum(yf * yf, axis=0, keepdims=True)


def _matmul_stats_call(p, w, mask, tm):
    m_pad, k_pad = p.shape
    c_pad = w.shape[1]
    assert m_pad % tm == 0 and mask.shape == (tm, 1)
    nt = m_pad // tm
    return pl.pallas_call(
        _matmul_stats_kernel,
        out_shape=(jax.ShapeDtypeStruct((m_pad, c_pad), jnp.bfloat16),
                   jax.ShapeDtypeStruct((nt, 8, c_pad), jnp.float32)),
        grid=(nt,),
        in_specs=[pl.BlockSpec((tm, k_pad), lambda i: (i, 0)),
                  pl.BlockSpec((k_pad, c_pad), lambda i: (0, 0)),
                  pl.BlockSpec((tm, 1), lambda i: (0, 0))],
        out_specs=(pl.BlockSpec((tm, c_pad), lambda i: (i, 0)),
                   pl.BlockSpec((1, 8, c_pad), lambda i: (i, 0, 0))),
        compiler_params=pltpu.CompilerParams(
            dimension_semantics=("parallel",),
            vmem_limit_bytes=_VMEM_LIMIT),
    )(p, w, mask)


# ---------------------------------------------------------------------------
# Kernel 3: fused BN apply (+ optional shortcut-BN + residual) (+ ReLU)
# ---------------------------------------------------------------------------
def _bn_apply_kernel(*refs, relu, has_residual, has_mask):
    y_ref, s_ref, b_ref = refs[0], refs[1], refs[2]
    i = 3
    if has_mask:
        mask_ref = refs[i]; i += 1
    if has_residual:
        r_ref, rs_ref, rb_ref = refs[i], refs[i + 1], refs[i + 2]; i += 3
    o_ref = refs[i]
    # All element-wise math in f32 (v5e has no bf16 VPU); BN is a single FMA.
    y = y_ref[...].astype(jnp.float32) * s_ref[...] + b_ref[...]
    if has_residual:
        y = y + (r_ref[...].astype(jnp.float32) * rs_ref[...] + rb_ref[...])
    if relu:
        y = jnp.maximum(y, 0.0)
    if has_mask:
        y = y * mask_ref[...]          # zero the halo ring / padding rows
    o_ref[...] = y.astype(o_ref.dtype)


def bn_apply(y, scale, shift, *, tm, relu, out_dtype,
             residual=None, rscale=None, rshift=None, mask=None):
    m_pad, c_pad = y.shape
    assert m_pad % tm == 0
    nt = m_pad // tm
    args = [y, scale, shift]
    in_specs = [pl.BlockSpec((tm, c_pad), lambda i: (i, 0)),
                pl.BlockSpec((1, c_pad), lambda i: (0, 0)),
                pl.BlockSpec((1, c_pad), lambda i: (0, 0))]
    if mask is not None:
        args.append(mask)
        in_specs.append(pl.BlockSpec((tm, 1), lambda i: (0, 0)))
    if residual is not None:
        args += [residual, rscale, rshift]
        in_specs += [pl.BlockSpec((tm, c_pad), lambda i: (i, 0)),
                     pl.BlockSpec((1, c_pad), lambda i: (0, 0)),
                     pl.BlockSpec((1, c_pad), lambda i: (0, 0))]
    kern = functools.partial(_bn_apply_kernel, relu=relu,
                             has_residual=residual is not None,
                             has_mask=mask is not None)
    return pl.pallas_call(
        kern,
        out_shape=jax.ShapeDtypeStruct((m_pad, c_pad), out_dtype),
        grid=(nt,),
        in_specs=in_specs,
        out_specs=pl.BlockSpec((tm, c_pad), lambda i: (i, 0)),
        compiler_params=pltpu.CompilerParams(
            dimension_semantics=("parallel",),
            vmem_limit_bytes=_VMEM_LIMIT),
    )(*args)


# ---------------------------------------------------------------------------
# Strided 3x3 conv fallback (HBM im2col, bf16, padding folded into build)
# ---------------------------------------------------------------------------
def conv3x3_im2col(x_bf16, w9, gamma, beta, stride):
    n_img, H, W, cin = x_bf16.shape
    ho = (H - 1) // stride + 1
    wo = (W - 1) // stride + 1
    m = n_img * ho * wo
    cout = w9.shape[-1]
    c_pad = _round_up(cout, 128)
    k = 9 * cin
    k_pad = _pad_k(k)
    tm, m_pad = _pick_tiling(m)
    xp = jnp.pad(x_bf16, ((0, 0), (1, 1), (1, 1), (0, 0)))
    cols = [xp[:, dy:dy + stride * (ho - 1) + 1:stride,
               dx:dx + stride * (wo - 1) + 1:stride, :].reshape(m, cin)
            for dy in range(3) for dx in range(3)]
    if k_pad > k:
        cols.append(jnp.zeros((m, k_pad - k), x_bf16.dtype))
    p = jnp.concatenate(cols, axis=1)
    if m_pad > m:
        p = jnp.pad(p, ((0, m_pad - m), (0, 0)))
    w = jnp.pad(w9.reshape(k, cout),
                ((0, k_pad - k), (0, c_pad - cout))).astype(jnp.bfloat16)
    ones = jnp.ones((tm, 1), jnp.float32)   # zero-padded rows contribute 0
    y, stats = _matmul_stats_call(p, w, ones, tm=tm)
    scale, shift = _fold_bn(stats, m, gamma, beta, c_pad)
    return y, scale, shift, tm


# ---------------------------------------------------------------------------
# 1x1 projection shortcut (raw matmul; its BN folds into the final epilogue)
# ---------------------------------------------------------------------------
def shortcut_proj(x_bf16, ws, gamma, beta, stride, hp, wp, rows, mask):
    n_img, _, _, cin = x_bf16.shape
    planes = ws.shape[0]
    c_pad = _round_up(planes, 128)
    k_pad = _pad_k(cin)
    xs = x_bf16[:, ::stride, ::stride, :]                        # (N, ho, wo, cin)
    xsp = jnp.pad(xs, ((0, 0), (1, 1), (1, 1), (0, 0)))          # conv2's grid
    lhs = jnp.pad(xsp.reshape(n_img, hp * wp, cin),
                  ((0, 0), (0, rows - hp * wp), (0, k_pad - cin)))
    lhs = lhs.reshape(n_img * rows, k_pad)
    wsm = jnp.pad(ws.reshape(planes, cin).T,
                  ((0, k_pad - cin), (0, c_pad - planes))).astype(jnp.bfloat16)
    y, stats = _matmul_stats_call(lhs, wsm, mask, tm=rows)
    scale, shift = _fold_bn(stats, n_img * (hp - 2) * (wp - 2), gamma, beta, c_pad)
    return y, scale, shift


# ---------------------------------------------------------------------------
# Parameters (deterministic, synthetic - shapes per BasicBlock.__init__)
# ---------------------------------------------------------------------------
def init_basic_block(key, in_planes, planes, stride=1):
    ks = jax.random.split(key, 9)
    p = {
        "stride": stride,
        "proj": (stride != 1) or (in_planes != planes),
        "w1": 0.1 * jax.random.normal(ks[0], (planes, in_planes, 3, 3), jnp.float32),
        "g1": 1.0 + 0.1 * jax.random.normal(ks[1], (planes,), jnp.float32),
        "b1": 0.1 * jax.random.normal(ks[2], (planes,), jnp.float32),
        "w2": 0.1 * jax.random.normal(ks[3], (planes, planes, 3, 3), jnp.float32),
        "g2": 1.0 + 0.1 * jax.random.normal(ks[4], (planes,), jnp.float32),
        "b2": 0.1 * jax.random.normal(ks[5], (planes,), jnp.float32),
    }
    if p["proj"]:
        p["ws"] = 0.1 * jax.random.normal(ks[6], (planes, in_planes, 1, 1), jnp.float32)
        p["gs"] = 1.0 + 0.1 * jax.random.normal(ks[7], (planes,), jnp.float32)
        p["bs"] = 0.1 * jax.random.normal(ks[8], (planes,), jnp.float32)
    return p


# ---------------------------------------------------------------------------
# BasicBlock forward (Pallas)
# ---------------------------------------------------------------------------
def basic_block_forward(params, x_nchw):
    x = jnp.transpose(x_nchw, (0, 2, 3, 1)).astype(jnp.bfloat16)  # NHWC, bf16 once
    n_img, H, W, cin = x.shape
    stride = int(params["stride"])
    planes = params["w1"].shape[0]
    ho = (H - 1) // stride + 1
    wo = (W - 1) // stride + 1
    m = n_img * ho * wo
    c_pad = _round_up(planes, 128)
    hp, wp = ho + 2, wo + 2                    # conv2's halo-padded grid
    rows = _round_up(hp * wp, 8)               # per-image padded-flat rows
    mask = _valid_mask(hp, wp, rows)

    w1_9 = jnp.transpose(params["w1"], (2, 3, 1, 0)).reshape(9, cin, planes)
    w2_9 = jnp.transpose(params["w2"], (2, 3, 1, 0)).reshape(9, planes, planes)

    # --- conv1 + bn1 + relu -> zero-halo bf16 activation on conv2's grid ---
    if stride == 1:
        xp1 = jnp.pad(x, ((0, 0), (1, 1), (1, 1), (0, 0)))
        y1, s1, b1 = conv3x3_s1_fused(xp1, w1_9, params["g1"], params["b1"])
        # Epilogue stays in padded-flat layout; the mask zeroes the halo ring
        # so the result is directly conv2's zero-halo input.
        a1 = bn_apply(y1, s1, b1, tm=rows, relu=True,
                      out_dtype=jnp.bfloat16, mask=mask)
        xp2 = a1.reshape(n_img, rows, c_pad)[:, :hp * wp, :planes] \
                .reshape(n_img, hp, wp, planes)
    else:
        y1, s1, b1, tm1 = conv3x3_im2col(x, w1_9, params["g1"], params["b1"],
                                         stride)
        a1 = bn_apply(y1, s1, b1, tm=tm1, relu=True, out_dtype=jnp.bfloat16)
        out1 = a1[:m, :planes].reshape(n_img, ho, wo, planes)
        xp2 = jnp.pad(out1, ((0, 0), (1, 1), (1, 1), (0, 0)))

    # --- conv2 + bn2 stats (fused, stride 1) ---
    y2, s2, b2 = conv3x3_s1_fused(xp2, w2_9, params["g2"], params["b2"])

    # --- shortcut (raw conv output; its BN folds into the final epilogue) ---
    if params["proj"]:
        ys, ss, bs = shortcut_proj(x, params["ws"], params["gs"], params["bs"],
                                   stride, hp, wp, rows, mask)
    else:
        # Identity: residual is just x laid out on conv2's padded-flat grid.
        xsp = jnp.pad(x, ((0, 0), (1, 1), (1, 1), (0, 0)))
        ys = jnp.pad(xsp.reshape(n_img, hp * wp, cin),
                     ((0, 0), (0, rows - hp * wp), (0, c_pad - cin)))
        ys = ys.reshape(n_img * rows, c_pad)
        ss = jnp.ones((1, c_pad), jnp.float32)
        bs = jnp.zeros((1, c_pad), jnp.float32)

    # --- final epilogue: bn2 + shortcut-BN + residual add + relu, one pass ---
    # (final output kept f32 to match the nn.Module; bf16 would halve stores)
    out = bn_apply(y2, s2, b2, tm=rows, relu=True, out_dtype=jnp.float32,
                   residual=ys, rscale=ss, rshift=bs)

    out = out.reshape(n_img, rows, c_pad)[:, :hp * wp, :planes] \
             .reshape(n_img, hp, wp, planes)[:, 1:ho + 1, 1:wo + 1, :]
    return jnp.transpose(out, (0, 3, 1, 2))       # NHWC -> NCHW


# ---------------------------------------------------------------------------
# Pure-JAX f32 reference (sanity check)
# ---------------------------------------------------------------------------
def _bn_ref(y, gamma, beta):
    mean = jnp.mean(y, axis=(0, 1, 2), keepdims=True)
    var = jnp.mean((y - mean) ** 2, axis=(0, 1, 2), keepdims=True)
    return (y - mean) * jax.lax.rsqrt(var + EPS) * gamma + beta


def _conv_ref(x_nhwc, w_oihw, stride, padding):
    w_hwio = jnp.transpose(w_oihw, (2, 3, 1, 0))
    return jax.lax.conv_general_dilated(
        x_nhwc, w_hwio, (stride, stride), [(padding, padding)] * 2,
        dimension_numbers=("NHWC", "HWIO", "NHWC"))


def basic_block_ref(params, x_nchw):
    x = jnp.transpose(x_nchw, (0, 2, 3, 1))
    o = jax.nn.relu(_bn_ref(_conv_ref(x, params["w1"], params["stride"], 1),
                            params["g1"], params["b1"]))
    o = _bn_ref(_conv_ref(o, params["w2"], 1, 1), params["g2"], params["b2"])
    if params["proj"]:
        sc = _bn_ref(_conv_ref(x, params["ws"], params["stride"], 0),
                     params["gs"], params["bs"])
    else:
        sc = x
    return jnp.transpose(jax.nn.relu(o + sc), (0, 3, 1, 2))


if __name__ == "__main__":
    key = jax.random.PRNGKey(0)
    kx1, kp1, kx2, kp2 = jax.random.split(key, 4)

    # Case 1: projection shortcut (stride 2, channel change) — exercises the
    # im2col fallback, the 1x1 shortcut matmul, the fused conv2 and both
    # epilogue variants.
    x1 = jax.random.normal(kx1, (2, 4, 16, 16), jnp.float32)
    params1 = init_basic_block(kp1, 4, 8, stride=2)
    out1 = jax.block_until_ready(basic_block_forward(params1, x1))
    assert out1.shape == (2, 8, 8, 8), out1.shape
    ref1 = jax.block_until_ready(basic_block_ref(params1, x1))
    err1 = float(jnp.max(jnp.abs(out1 - ref1)))
    # Error budget: bf16 input/activation/residual + two bf16 MXU convs
    # (BN re-amplifies the relative matmul rounding error).
    assert err1 < 6e-2, f"proj-path max abs err {err1}"

    # Case 2: identity shortcut (stride 1) — exercises the fused conv1 path
    # and the bf16 identity residual.
    x2 = jax.random.normal(kx2, (2, 8, 8, 8), jnp.float32)
    params2 = init_basic_block(kp2, 8, 8, stride=1)
    out2 = jax.block_until_ready(basic_block_forward(params2, x2))
    assert out2.shape == (2, 8, 8, 8), out2.shape
    ref2 = jax.block_until_ready(basic_block_ref(params2, x2))
    err2 = float(jnp.max(jnp.abs(out2 - ref2)))
    assert err2 < 6e-2, f"identity-path max abs err {err2}"

    print("KERNEL_OK")
</pallas_src>

<mosaic_0001>
module attributes {stable_mosaic.version = 11 : i64} {
  func.func @_matmul_stats_kernel(%arg0: i32, %arg1: memref<64x48xbf16, #tpu.memory_space<vmem>>, %arg2: memref<48x128xbf16, #tpu.memory_space<vmem>>, %arg3: memref<64x1xf32, #tpu.memory_space<vmem>>, %arg4: memref<64x128xbf16, #tpu.memory_space<vmem>>, %arg5: memref<1x8x128xf32, #tpu.memory_space<vmem>>) attributes {dimension_semantics = [#tpu.dimension_semantics<parallel>], iteration_bounds = array<i64: 2>, scalar_prefetch = 0 : i64, scratch_operands = 0 : i64, tpu.core_type = #tpu.core_type<tc>, window_params = [{transform_indices = @transform_0, window_bounds = array<i64: 64, 48>}, {pipeline_mode = #tpu.pipeline_mode<synchronous>, transform_indices = @transform_1, window_bounds = array<i64: 48, 128>}, {pipeline_mode = #tpu.pipeline_mode<synchronous>, transform_indices = @transform_2, window_bounds = array<i64: 64, 1>}, {transform_indices = @transform_3, window_bounds = array<i64: 64, 128>}, {transform_indices = @transform_4, window_bounds = array<i64: 1, 8, 128>}]} {
    %c0 = arith.constant 0 : index
    %c0_0 = arith.constant 0 : index
    %0 = vector.load %arg1[%c0, %c0_0] : memref<64x48xbf16, #tpu.memory_space<vmem>>, vector<64x48xbf16>
    %c0_1 = arith.constant 0 : index
    %c0_2 = arith.constant 0 : index
    %1 = vector.load %arg2[%c0_1, %c0_2] : memref<48x128xbf16, #tpu.memory_space<vmem>>, vector<48x128xbf16>
    %cst = arith.constant dense<0.000000e+00> : vector<64x128xf32>
    %2 = tpu.matmul %0, %1, %cst {dimension_numbers = #tpu.dot_dimension_numbers<[1], [0], [0], [1], [0, 0, 1, 1], [], []>} : vector<64x48xbf16>, vector<48x128xbf16>, vector<64x128xf32> -> vector<64x128xf32>
    %3 = arith.truncf %2 : vector<64x128xf32> to vector<64x128xbf16>
    %c0_3 = arith.constant 0 : index
    %c0_4 = arith.constant 0 : index
    %4 = vector.load %arg4[%c0_3, %c0_4] : memref<64x128xbf16, #tpu.memory_space<vmem>>, vector<64x128xbf16>
    tpu.vector_store %arg4[%c0_3, %c0_4], %3 {strides = array<i32>} : memref<64x128xbf16, #tpu.memory_space<vmem>>, vector<64x128xbf16>,
    %5 = arith.extf %3 : vector<64x128xbf16> to vector<64x128xf32>
    %c0_5 = arith.constant 0 : index
    %c0_6 = arith.constant 0 : index
    %6 = vector.load %arg3[%c0_5, %c0_6] : memref<64x1xf32, #tpu.memory_space<vmem>>, vector<64x1xf32>
    %7 = vector.broadcast %6 : vector<64x1xf32> to vector<64x128xf32>
    %8 = arith.mulf %5, %7 : vector<64x128xf32>
    %cst_7 = arith.constant dense<0.000000e+00> : vector<128xf32>
    %9 = vector.multi_reduction <add>, %8, %cst_7 [0] : vector<64x128xf32> to vector<128xf32>
    %10 = vector.shape_cast %9 : vector<128xf32> to vector<1x128xf32>
    %c0_8 = arith.constant 0 : index
    %c0_9 = arith.constant 0 : index
    %c0_10 = arith.constant 0 : index
    %11 = vector.load %arg5[%c0_8, %c0_9, %c0_10] : memref<1x8x128xf32, #tpu.memory_space<vmem>>, vector<1x1x128xf32>
    %12 = vector.shape_cast %11 : vector<1x1x128xf32> to vector<1x128xf32>
    %13 = vector.shape_cast %10 : vector<1x128xf32> to vector<1x1x128xf32>
    tpu.vector_store %arg5[%c0_8, %c0_9, %c0_10], %13 {strides = array<i32>} : memref<1x8x128xf32, #tpu.memory_space<vmem>>, vector<1x1x128xf32>,
    %14 = arith.mulf %8, %8 : vector<64x128xf32>
    %cst_11 = arith.constant dense<0.000000e+00> : vector<128xf32>
    %15 = vector.multi_reduction <add>, %14, %cst_11 [0] : vector<64x128xf32> to vector<128xf32>
    %16 = vector.shape_cast %15 : vector<128xf32> to vector<1x128xf32>
    %c0_12 = arith.constant 0 : index
    %c1 = arith.constant 1 : index
    %c0_13 = arith.constant 0 : index
    %17 = vector.load %arg5[%c0_12, %c1, %c0_13] : memref<1x8x128xf32, #tpu.memory_space<vmem>>, vector<1x1x128xf32>
    %18 = vector.shape_cast %17 : vector<1x1x128xf32> to vector<1x128xf32>
    %19 = vector.shape_cast %16 : vector<1x128xf32> to vector<1x1x128xf32>
    tpu.vector_store %arg5[%c0_12, %c1, %c0_13], %19 {strides = array<i32>} : memref<1x8x128xf32, #tpu.memory_space<vmem>>, vector<1x1x128xf32>,
    return
  }
  func.func @transform_0(%arg0: i32) -> (i32, i32) {
    %c0_i32 = arith.constant 0 : i32
    %c0_i32_0 = arith.constant 0 : i32
    return %arg0, %c0_i32 : i32, i32
  }
  func.func @transform_1(%arg0: i32) -> (i32, i32) {
    %c0_i32 = arith.constant 0 : i32
    %c0_i32_0 = arith.constant 0 : i32
    %c0_i32_1 = arith.constant 0 : i32
    return %c0_i32, %c0_i32_0 : i32, i32
  }
  func.func @transform_2(%arg0: i32) -> (i32, i32) {
    %c0_i32 = arith.constant 0 : i32
    %c0_i32_0 = arith.constant 0 : i32
    %c0_i32_1 = arith.constant 0 : i32
    return %c0_i32, %c0_i32_0 : i32, i32
  }
  func.func @transform_3(%arg0: i32) -> (i32, i32) {
    %c0_i32 = arith.constant 0 : i32
    %c0_i32_0 = arith.constant 0 : i32
    return %arg0, %c0_i32 : i32, i32
  }
  func.func @transform_4(%arg0: i32) -> (i32, i32, i32) {
    %c0_i32 = arith.constant 0 : i32
    %c0_i32_0 = arith.constant 0 : i32
    %c0_i32_1 = arith.constant 0 : i32
    return %arg0, %c0_i32, %c0_i32_0 : i32, i32, i32
  }
}

</mosaic_0001>

<llo_original>
// kernel: tpu_custom_call.1
$region0: #{tpu_custom_call.1}
  #allocation0 [shape = 'u32[]', space=smem, size = 0x4, offset = 0x4, fixed_abs, tag = 'smem constant byte address 0x4 - core index']
  #allocation1 [shape = 'u32[144,128]{1,0:T(1,128)}', space=vmem, size = 0x12000, scoped, tag = 'internal scratch']
  %s0 = inlined_call_operand.vmem [shape: bf16[128,48], index: 0, kind: input, shape index: {}]
  %s1 = inlined_call_operand.vmem [shape: bf16[48,128], index: 1, kind: input, shape index: {}]
  %s2 = inlined_call_operand.vmem [shape: f32[64,1], index: 2, kind: input, shape index: {}]
  %s3 = inlined_call_operand.hbm [shape: bf16[128,128], index: 3, kind: output, shape index: {0}]
  %s4 = inlined_call_operand.hbm [shape: f32[2,8,128], index: 4, kind: output, shape index: {1}]
  %5 = xla_tuple %s3, %s4
  %s6 = sld [smem:[#allocation0]]
  $region53: #{tpu_custom_call.1} parent=0
    _
  %s8 = ssub.s32 1, %s6
  %s9 = scalar_select 0, %s8, %s6
  $region1: #{tpu_custom_call.1} parent=0
    #allocation2 [shape = 'u8[32768]{0}', space=vmem, size = 0x8000, scoped, tag = 'output window, operand 0']
    #allocation3 [shape = 's32[2]{0}', space=sflag, size = 0x8, scoped, tag = 'scoped memory for tpu_custom_call.1']
    #allocation4 [shape = 'u8[8192]{0}', space=vmem, size = 0x2000, scoped, tag = 'output window, operand 1']
    #allocation5 [shape = 's32[2]{0}', space=sflag, size = 0x8, scoped, tag = 'scoped memory for tpu_custom_call.1']
    %10 = vsyncpa [#allocation3], 0
    %s11 = scalar_lea.sflag [#allocation3], 1
    %12 = vsyncpa %s11, 0
    %13 = vsyncpa [#allocation5], 0
    %s14 = scalar_lea.sflag [#allocation5], 1
    %15 = vsyncpa %s14, 0
    loop: start=0, step=1, limit=4
    $region2: #{tpu_custom_call.1} parent=1 // loop_pre_header
      _
    $region3: #{tpu_custom_call.1} parent=1 // loop_header
      %s17 = sphi 0, %s21
      %p18 = scmp.ge.s32.totalorder %s17, 4
      %s27 = sphi 0, %s29
      %s30 = sphi 0, %s27
      %s31 = sphi 0, %s30
      %s47 = sphi 0, %s31
      %s51 = sphi 0, %s51
      %s53 = sphi 0, %s51
      %s54 = sphi 0, %s53
      %s68 = sphi 0, %s54
      %s72 = sphi 0, %s72
      %s74 = sphi 0, %s72
      %s75 = sphi 0, %s74
      %s89 = sphi 0, %s75
      %s95 = sphi 0, %s97
      %s98 = sphi 0, %s95
      %s99 = sphi 0, %s98
      %s115 = sphi 0, %s99
      %s121 = sphi 0, %s123
      %s124 = sphi 0, %s121
      %s125 = sphi 0, %s124
      %s141 = sphi 0, %s125
    $region4: #{tpu_custom_call.1} parent=1 // loop_header_branch
      %20 = sbr.rel (%p18) target = $region8
    $region5: #{tpu_custom_call.1} parent=1 // loop_body
      %s22 = ssub.s32 %s17, 1
      %s23 = ssub.s32 %s17, 2
      %s24 = sadd.s32 %s17, 1
      %s25 = ssub.s32 %s17, %s24
      %p26 = scmp.eq.s32.totalorder %s25, 0
      %s28 = sadd.s32 %s27, 1
      %s29 = scalar_select %p26, %s27, %s28
      %p32 = pneg %p26
      %p33 = scmp.eq.s32.totalorder %s17, 1
      %p34 = por %p32, %p33
      %p35 = scmp.ne.s32.totalorder %s27, %s30
      %p36 = scmp.eq.s32.totalorder %s17, 0
      %p37 = por %p35, %p36
      %p38 = scmp.ne.s32.totalorder %s27, %s30
      %p39 = scmp.eq.s32.totalorder %s22, 1
      %p40 = por %p38, %p39
      %p41 = scmp.ne.s32.totalorder %s30, %s31
      %p42 = scmp.eq.s32.totalorder %s22, 0
      %p43 = por %p41, %p42
      %p44 = scmp.ne.s32.totalorder %s30, %s31
      %p45 = scmp.eq.s32.totalorder %s23, 1
      %p46 = por %p44, %p45
      %p48 = scmp.ne.s32.totalorder %s31, %s47
      %p49 = scmp.eq.s32.totalorder %s23, 0
      %p50 = por %p48, %p49
      %s52 = sadd.s32 %s51, 1
      %p55 = scmp.eq.s32.totalorder %s17, 1
      %p56 = scmp.ne.s32.totalorder %s51, %s53
      %p57 = scmp.eq.s32.totalorder %s17, 0
      %p58 = por %p56, %p57
      %p59 = scmp.ne.s32.totalorder %s51, %s53
      %p60 = scmp.eq.s32.totalorder %s22, 1
      %p61 = por %p59, %p60
      %p62 = scmp.ne.s32.totalorder %s53, %s54
      %p63 = scmp.eq.s32.totalorder %s22, 0
      %p64 = por %p62, %p63
      %p65 = scmp.ne.s32.totalorder %s53, %s54
      %p66 = scmp.eq.s32.totalorder %s23, 1
      %p67 = por %p65, %p66
      %p69 = scmp.ne.s32.totalorder %s54, %s68
      %p70 = scmp.eq.s32.totalorder %s23, 0
      %p71 = por %p69, %p70
      %s73 = sadd.s32 %s72, 1
      %p76 = scmp.eq.s32.totalorder %s17, 1
      %p77 = scmp.ne.s32.totalorder %s72, %s74
      %p78 = scmp.eq.s32.totalorder %s17, 0
      %p79 = por %p77, %p78
      %p80 = scmp.ne.s32.totalorder %s72, %s74
      %p81 = scmp.eq.s32.totalorder %s22, 1
      %p82 = por %p80, %p81
      %p83 = scmp.ne.s32.totalorder %s74, %s75
      %p84 = scmp.eq.s32.totalorder %s22, 0
      %p85 = por %p83, %p84
      %p86 = scmp.ne.s32.totalorder %s74, %s75
      %p87 = scmp.eq.s32.totalorder %s23, 1
      %p88 = por %p86, %p87
      %p90 = scmp.ne.s32.totalorder %s75, %s89
      %p91 = scmp.eq.s32.totalorder %s23, 0
      %p92 = por %p90, %p91
      %s93 = ssub.s32 %s17, %s24
      %p94 = scmp.eq.s32.totalorder %s93, 0
      %s96 = sadd.s32 %s95, 1
      %s97 = scalar_select %p94, %s95, %s96
      %p100 = pneg %p94
      %p101 = scmp.eq.s32.totalorder %s17, 1
      %p102 = por %p100, %p101
      %p103 = scmp.ne.s32.totalorder %s95, %s98
      %p104 = scmp.eq.s32.totalorder %s17, 0
      %p105 = por %p103, %p104
      %p106 = scmp.ne.s32.totalorder %s95, %s98
      %p107 = scmp.eq.s32.totalorder %s22, 1
      %p108 = por %p106, %p107
      %p109 = scmp.ne.s32.totalorder %s98, %s99
      %p110 = scmp.eq.s32.totalorder %s22, 0
      %p111 = por %p109, %p110
      %p112 = scmp.ne.s32.totalorder %s98, %s99
      %p113 = scmp.eq.s32.totalorder %s23, 1
      %p114 = por %p112, %p113
      %p116 = scmp.ne.s32.totalorder %s99, %s115
      %p117 = scmp.eq.s32.totalorder %s23, 0
      %p118 = por %p116, %p117
      %s119 = ssub.s32 %s17, %s24
      %p120 = scmp.eq.s32.totalorder %s119, 0
      %s122 = sadd.s32 %s121, 1
      %s123 = scalar_select %p120, %s121, %s122
      %p126 = pneg %p120
      %p127 = scmp.eq.s32.totalorder %s17, 1
      %p128 = por %p126, %p127
      %p129 = scmp.ne.s32.totalorder %s121, %s124
      %p130 = scmp.eq.s32.totalorder %s17, 0
      %p131 = por %p129, %p130
      %p132 = scmp.ne.s32.totalorder %s121, %s124
      %p133 = scmp.eq.s32.totalorder %s22, 1
      %p134 = por %p132, %p133
      %p135 = scmp.ne.s32.totalorder %s124, %s125
      %p136 = scmp.eq.s32.totalorder %s22, 0
      %p137 = por %p135, %p136
      %p138 = scmp.ne.s32.totalorder %s124, %s125
      %p139 = scmp.eq.s32.totalorder %s23, 1
      %p140 = por %p138, %p139
      %p142 = scmp.ne.s32.totalorder %s125, %s141
      %p143 = scmp.eq.s32.totalorder %s23, 0
      %p144 = por %p142, %p143
      %p145 = scmp.le.s32.totalorder 1, %s17
      %p146 = scmp.lt.s32.totalorder %s17, 3
      %p147 = pnand %p145, %p146
      %p148 = pneg %p147
      // Predicated region
      $region9: #{tpu_custom_call.1} parent=5 // pred_check
        _
      $region10: #{tpu_custom_call.1} parent=5 // pred_check_branch
        %150 = sbr.rel (%p147) target = $region12
      $region11: #{tpu_custom_call.1} parent=5 // pred_region
        %s151 = ssub.s32 %s17, 1
        // Predicated region
        $region13: #{tpu_custom_call.1} parent=11 // pred_check
          %p152 = pneg %p64
        $region14: #{tpu_custom_call.1} parent=11 // pred_check_branch
          %154 = sbr.rel (%p152) target = $region16
        $region15: #{tpu_custom_call.1} parent=11 // pred_region
          _
        $region16: #{tpu_custom_call.1} parent=11 // pred_fallthru
          _
        // Predicated region
        $region17: #{tpu_custom_call.1} parent=11 // pred_check
          %p155 = pneg %p85
        $region18: #{tpu_custom_call.1} parent=11 // pred_check_branch
          %157 = sbr.rel (%p155) target = $region20
        $region19: #{tpu_custom_call.1} parent=11 // pred_region
          _
        $region20: #{tpu_custom_call.1} parent=11 // pred_fallthru
          _
      $region12: #{tpu_custom_call.1} parent=5 // pred_fallthru
        _
      %p158 = scmp.lt.s32.totalorder %s17, 2
      // Predicated region
      $region21: #{tpu_custom_call.1} parent=5 // pred_check
        %p159 = pneg %p158
      $region22: #{tpu_custom_call.1} parent=5 // pred_check_branch
        %161 = sbr.rel (%p159) target = $region24
      $region23: #{tpu_custom_call.1} parent=5 // pred_region
        // Predicated region
        $region25: #{tpu_custom_call.1} parent=23 // pred_check
          %p162 = pneg %p37
        $region26: #{tpu_custom_call.1} parent=23 // pred_check_branch
          %164 = sbr.rel (%p162) target = $region28
        $region27: #{tpu_custom_call.1} parent=23 // pred_region
          %s165 = smul.u32 8, %s17
          %p166 = scmp.lt.s32.totalorder %s165, 15
          %s167 = scalar_select %p166, %s165, 15
          %s168 = smul.addr %s167, 4
          %s169 = scalar_lea.vmem %s0, %s168
          %s170 = smul.u32 8, %s17
        $region28: #{tpu_custom_call.1} parent=23 // pred_fallthru
          _
      $region24: #{tpu_custom_call.1} parent=5 // pred_fallthru
        _
      %p171 = scmp.le.s32.totalorder 1, %s17
      %p172 = scmp.lt.s32.totalorder %s17, 3
      %p173 = pnand %p171, %p172
      %p174 = pneg %p173
      // Predicated region
      $region29: #{tpu_custom_call.1} parent=5 // pred_check
        _
      $region30: #{tpu_custom_call.1} parent=5 // pred_check_branch
        %176 = sbr.rel (%p173) target = $region32
      $region31: #{tpu_custom_call.1} parent=5 // pred_region
        %s177 = ssub.s32 %s17, 1
        %s178 = smul.u32 8, %s22
        %p179 = scmp.lt.s32.totalorder %s178, 15
        %s180 = scalar_select %p179, %s178, 15
        %s181 = smul.addr %s180, 4
        %s182 = scalar_lea.vmem %s0, %s181
        %p183 = pneg %p43
        %p184 = pneg %p40
        %p185 = pneg %p64
        %p186 = pneg %p61
        %p187 = pneg %p85
        %p188 = pneg %p82
        %p189 = pneg %p111
        %p190 = pneg %p108
        %s191 = sand.u32 %s98, 1
        %s192 = scalar_lea.sflag [#allocation3], %s191
        %s193 = sand.u32 %s98, 1
        %s194 = smul.addr %s193, 32
        %s195 = scalar_lea.vmem [#allocation2], %s194
        %p196 = pneg %p137
        %p197 = pneg %p134
        %s198 = sand.u32 %s124, 1
        %s199 = scalar_lea.sflag [#allocation5], %s198
        %s200 = sand.u32 %s124, 1
        %s201 = smul.addr %s200, 8
        %s202 = scalar_lea.vmem [#allocation4], %s201
        %s203 = smul.u32 8, %s22
        %p204 = scmp.lt.s32.totalorder %s203, 15
        %s205 = scalar_select %p204, %s203, 15
        %s206 = smul.addr %s205, 4
        %s207 = scalar_lea.vmem %s0, %s206
        %s208 = smul.u32 8, %s22
        %s209 = smul.u32 8, %s22
        %v211 = vld [vmem:[%s207] sm:$0xf]
        %v212 = vld [vmem:[%s207 + $0x4] sm:$0xf]
        %v213 = vld [vmem:[%s207 + $0x8] sm:$0xf]
        %v214 = vld [vmem:[%s207 + $0xc] sm:$0xf]
        %v215 = vld [vmem:[%s207 + $0x10] sm:$0xf]
        %v216 = vld [vmem:[%s207 + $0x14] sm:$0xf]
        %v217 = vld [vmem:[%s207 + $0x18] sm:$0xf]
        %v218 = vld [vmem:[%s207 + $0x1c] sm:$0xf]
        %v219 = vld [vmem:[%s1] sm:$0xf]
        %v220 = vld [vmem:[%s1 + $0x4] sm:$0xf]
        %v221 = vld [vmem:[%s1 + $0x8] sm:$0xf]
        %v222 = vld [vmem:[%s1 + $0xc] sm:$0xf]
        %v223 = vld [vmem:[%s1 + $0x10] sm:$0xf]
        %v224 = vld [vmem:[%s1 + $0x14] sm:$0xf]
        %v233 = vunpack.c.l.b16 %v211
        %v234 = vunpack.c.l.b16 %v212
        %v235 = vunpack.c.l.b16 %v213
        %v236 = vunpack.c.l.b16 %v214
        %v237 = vunpack.c.l.b16 %v215
        %v238 = vunpack.c.l.b16 %v216
        %v239 = vunpack.c.l.b16 %v217
        %v240 = vunpack.c.l.b16 %v218
        %v241 = vpack.c.b16 %v234, %v233
        %v242 = vpack.c.b16 %v236, %v235
        %v243 = vpack.c.b16 %v238, %v237
        %v244 = vpack.c.b16 %v240, %v239
        %v251 = vunpack.c.l.b16 %v219
        %v252 = vunpack.c.l.b16 %v220
        %v253 = vunpack.c.l.b16 %v221
        %v254 = vunpack.c.l.b16 %v222
        %v255 = vunpack.c.l.b16 %v223
        %v256 = vunpack.c.l.b16 %v224
        %v257 = vpack.c.b16 %v252, %v251
        %v258 = vpack.c.b16 %v254, %v253
        %v259 = vpack.c.b16 %v256, %v255
        %vm263 = vcmask 392192
        %v265 = vsel %vm263, %v241, 0
        %v268 = vsel %vm263, %v242, 0
        %v271 = vsel %vm263, %v243, 0
        %v274 = vsel %vm263, %v244, 0
        %276 = vmatprep.subr.bf16.mxu0 0
        %277 = vmatpush1.bf16.msra.mxu0 %v257
        %278 = vmatprep.subr.bf16.mxu0 0
        %279 = vmatpush1.bf16.msra.mxu0 %v258
        %280 = vmatprep.subr.bf16.mxu0 0
        %281 = vmatpush1.bf16.msra.mxu0 %v259
        %282 = vmatprep.subr.bf16.mxu0 0
        %283 = vmatpush1.bf16.msra.mxu0 0
        %284 = vmatprep.subr.bf16.mxu0 0
        %285 = vmatpush1.bf16.msra.mxu0 0
        %286 = vmatprep.subr.bf16.mxu0 0
        %287 = vmatpush1.bf16.msra.mxu0 0
        %288 = vmatprep.subr.bf16.mxu0 0
        %289 = vmatpush1.bf16.msra.mxu0 0
        %290 = vmatprep.subr.bf16.mxu0 0
        %291 = vmatpush1.bf16.msra.mxu0 0
        %292 = vmatprep.subr.bf16.mxu0 0
        %293 = vmatpush1.bf16.msra.mxu0 0
        %294 = vmatprep.subr.bf16.mxu0 0
        %295 = vmatpush1.bf16.msra.mxu0 0
        %296 = vmatprep.subr.bf16.mxu0 0
        %297 = vmatpush1.bf16.msra.mxu0 0
        %298 = vmatprep.subr.bf16.mxu0 0
        %299 = vmatpush1.bf16.msra.mxu0 0
        %300 = vmatprep.subr.bf16.mxu0 0
        %301 = vmatpush1.bf16.msra.mxu0 0
        %302 = vmatprep.subr.bf16.mxu0 0
        %303 = vmatpush1.bf16.msra.mxu0 0
        %304 = vmatprep.subr.bf16.mxu0 0
        %305 = vmatpush1.bf16.msra.mxu0 0
        %306 = vmatprep.subr.bf16.mxu0 0
        %307 = vmatpush1.bf16.msra.mxu0 0
        %308 = vmatprep.mubr.bf16.mxu0 0
        %309 = vmatmul.mubr.bf16.gmra.mrb[0].mxu0 %v265
        %v310 = vpop.f32.mrb[0].mxu0
        %v311 = vadd.f32 0.0, %v310
        %v312 = vpop.f32.mrb[0].mxu0
        %v313 = vpop.f32.mrb[0].mxu0
        %v314 = vadd.f32 0.0, %v313
        %v315 = vpop.f32.mrb[0].mxu0
        %316 = vmatprep.mubr.bf16.mxu0 0
        %317 = vmatmul.mubr.bf16.gmra.mrb[0].mxu0 %v268
        %v318 = vpop.f32.mrb[0].mxu0
        %v319 = vadd.f32 0.0, %v318
        %v320 = vpop.f32.mrb[0].mxu0
        %v321 = vpop.f32.mrb[0].mxu0
        %v322 = vadd.f32 0.0, %v321
        %v323 = vpop.f32.mrb[0].mxu0
        %324 = vmatprep.mubr.bf16.mxu0 0
        %325 = vmatmul.mubr.bf16.gmra.mrb[0].mxu0 %v271
        %v326 = vpop.f32.mrb[0].mxu0
        %v327 = vadd.f32 0.0, %v326
        %v328 = vpop.f32.mrb[0].mxu0
        %v329 = vpop.f32.mrb[0].mxu0
        %v330 = vadd.f32 0.0, %v329
        %v331 = vpop.f32.mrb[0].mxu0
        %332 = vmatprep.mubr.bf16.mxu0 0
        %333 = vmatmul.mubr.bf16.gmra.mrb[0].mxu0 %v274
        %v334 = vpop.f32.mrb[0].mxu0
        %v335 = vadd.f32 0.0, %v334
        %v336 = vpop.f32.mrb[0].mxu0
        %v337 = vpop.f32.mrb[0].mxu0
        %v338 = vadd.f32 0.0, %v337
        %v339 = vpop.f32.mrb[0].mxu0
        %340 = vdwg.mxu0
        %v341 = vpack.c.bf16 %v314, %v311
        %v342 = vpack.c.bf16 %v322, %v319
        %v343 = vpack.c.bf16 %v330, %v327
        %v344 = vpack.c.bf16 %v338, %v335
        %v349 = vunpack.c.l.b16 %v341
        %v350 = vunpack.c.h.b16 %v341
        %v351 = vunpack.c.l.b16 %v342
        %v352 = vunpack.c.h.b16 %v342
        %v353 = vunpack.c.l.b16 %v343
        %v354 = vunpack.c.h.b16 %v343
        %v355 = vunpack.c.l.b16 %v344
        %v356 = vunpack.c.h.b16 %v344
        %v357 = vpack.c.b16 %v349, %v349
        %v358 = vpack.c.b16 %v350, %v350
        %v359 = vpack.c.b16 %v351, %v351
        %v360 = vpack.c.b16 %v352, %v352
        %v361 = vpack.c.b16 %v353, %v353
        %v362 = vpack.c.b16 %v354, %v354
        %v363 = vpack.c.b16 %v355, %v355
        %v364 = vpack.c.b16 %v356, %v356
        %373 = vst [vmem:[%s195] sm:$0xf] %v357
        %374 = vst [vmem:[%s195 + $0x4] sm:$0xf] %v358
        %375 = vst [vmem:[%s195 + $0x8] sm:$0xf] %v359
        %376 = vst [vmem:[%s195 + $0xc] sm:$0xf] %v360
        %377 = vst [vmem:[%s195 + $0x10] sm:$0xf] %v361
        %378 = vst [vmem:[%s195 + $0x14] sm:$0xf] %v362
        %379 = vst [vmem:[%s195 + $0x18] sm:$0xf] %v363
        %380 = vst [vmem:[%s195 + $0x1c] sm:$0xf] %v364
        %v381 = vunpack.c.l.bf16 %v341
        %v382 = vunpack.c.h.bf16 %v341
        %v383 = vunpack.c.l.bf16 %v342
        %v384 = vunpack.c.h.bf16 %v342
        %v385 = vunpack.c.l.bf16 %v343
        %v386 = vunpack.c.h.bf16 %v343
        %v387 = vunpack.c.l.bf16 %v344
        %v388 = vunpack.c.h.bf16 %v344
        %v389 = vld [vmem:[%s2] sm:$0xff]
        %v390 = vld [vmem:[%s2 + $0x8] sm:$0xff]
        %v391 = vld [vmem:[%s2 + $0x10] sm:$0xff]
        %v392 = vld [vmem:[%s2 + $0x18] sm:$0xff]
        %v393 = vld [vmem:[%s2 + $0x20] sm:$0xff]
        %v394 = vld [vmem:[%s2 + $0x28] sm:$0xff]
        %v395 = vld [vmem:[%s2 + $0x30] sm:$0xff]
        %v396 = vld [vmem:[%s2 + $0x38] sm:$0xff]
        %398 = vset.pattern.permute.xlu0 0
        %399 = vperm.xlu0 %398, %v389
        %v400 = vpop.permute.xlu0 %399
        %403 = vset.pattern.permute.xlu0 0
        %404 = vperm.xlu0 %403, %v390
        %v405 = vpop.permute.xlu0 %404
        %408 = vset.pattern.permute.xlu0 0
        %409 = vperm.xlu0 %408, %v391
        %v410 = vpop.permute.xlu0 %409
        %413 = vset.pattern.permute.xlu0 0
        %414 = vperm.xlu0 %413, %v392
        %v415 = vpop.permute.xlu0 %414
        %418 = vset.pattern.permute.xlu0 0
        %419 = vperm.xlu0 %418, %v393
        %v420 = vpop.permute.xlu0 %419
        %423 = vset.pattern.permute.xlu0 0
        %424 = vperm.xlu0 %423, %v394
        %v425 = vpop.permute.xlu0 %424
        %428 = vset.pattern.permute.xlu0 0
        %429 = vperm.xlu0 %428, %v395
        %v430 = vpop.permute.xlu0 %429
        %433 = vset.pattern.permute.xlu0 0
        %434 = vperm.xlu0 %433, %v396
        %v435 = vpop.permute.xlu0 %434
        %v437 = vmul.f32 %v381, %v400
        %v438 = vmul.f32 %v382, %v405
        %v439 = vmul.f32 %v383, %v410
        %v440 = vmul.f32 %v384, %v415
        %v441 = vmul.f32 %v385, %v420
        %v442 = vmul.f32 %v386, %v425
        %v443 = vmul.f32 %v387, %v430
        %v444 = vmul.f32 %v388, %v435
        %v445 = vadd.f32 %v437, %v438
        %v446 = vadd.f32 %v445, %v439
        %v447 = vadd.f32 %v446, %v440
        %v448 = vadd.f32 %v447, %v441
        %v449 = vadd.f32 %v448, %v442
        %v450 = vadd.f32 %v449, %v443
        %v451 = vadd.f32 %v450, %v444
        %v452 = vrot.slane %v451, 4
        %v453 = vadd.f32 %v451, %v452
        %v454 = vrot.slane %v453, 2
        %v455 = vadd.f32 %v453, %v454
        %v456 = vrot.slane %v455, 1
        %v457 = vadd.f32 %v455, %v456
        %458 = vst [vmem:[%s202] sm:$0x1] %v457
        %v459 = vmul.f32 %v437, %v437
        %v460 = vmul.f32 %v438, %v438
        %v461 = vmul.f32 %v439, %v439
        %v462 = vmul.f32 %v440, %v440
        %v463 = vmul.f32 %v441, %v441
        %v464 = vmul.f32 %v442, %v442
        %v465 = vmul.f32 %v443, %v443
        %v466 = vmul.f32 %v444, %v444
        %v467 = vadd.f32 %v459, %v460
        %v468 = vadd.f32 %v467, %v461
        %v469 = vadd.f32 %v468, %v462
        %v470 = vadd.f32 %v469, %v463
        %v471 = vadd.f32 %v470, %v464
        %v472 = vadd.f32 %v471, %v465
        %v473 = vadd.f32 %v472, %v466
        %v474 = vrot.slane %v473, 4
        %v475 = vadd.f32 %v473, %v474
        %v476 = vrot.slane %v475, 2
        %v477 = vadd.f32 %v475, %v476
        %v478 = vrot.slane %v477, 1
        %v479 = vadd.f32 %v477, %v478
        %480 = vst [vmem:[%s202 + $0x1] sm:$0x1] %v479
        %s481 = sand.u32 %s98, 1
        %s482 = scalar_lea.sflag [#allocation3], %s481
        %s483 = sand.u32 %s98, 1
        %s484 = smul.addr %s483, 32
        %s485 = scalar_lea.vmem [#allocation2], %s484
        %s486 = sand.u32 %s124, 1
        %s487 = scalar_lea.sflag [#allocation5], %s486
        %s488 = sand.u32 %s124, 1
        %s489 = smul.addr %s488, 8
        %s490 = scalar_lea.vmem [#allocation4], %s489
        // Predicated region
        $region33: #{tpu_custom_call.1} parent=31 // pred_check
          %p491 = pneg %p108
        $region34: #{tpu_custom_call.1} parent=31 // pred_check_branch
          %493 = sbr.rel (%p491) target = $region36
        $region35: #{tpu_custom_call.1} parent=31 // pred_region
          %s494 = smul.u32 8, %s22
          %s496 = ssub.s32 512, 512
          %497 = vsyncadd %s482, %s496
          %s498 = smul.addr %s494, 64
          %s499 = scalar_lea.hbm %s3, %s498
          %s500 = sshll.u32 %s485, 4
          %s501 = int_to_ptr.vmem [resolvable:$true] %s500
          %506 = dma.vmem_to_hbm [thread:$0]  %s501, 512, %s499, %s482, 64, 64, 4
        $region36: #{tpu_custom_call.1} parent=31 // pred_fallthru
          _
        // Predicated region
        $region37: #{tpu_custom_call.1} parent=31 // pred_check
          %p507 = pneg %p134
        $region38: #{tpu_custom_call.1} parent=31 // pred_check_branch
          %509 = sbr.rel (%p507) target = $region40
        $region39: #{tpu_custom_call.1} parent=31 // pred_region
          %s511 = ssub.s32 128, 128
          %512 = vsyncadd %s487, %s511
          %s513 = smul.addr %s22, 128
          %s514 = scalar_lea.hbm %s4, %s513
          %s516 = sshll.u32 %s490, 4
          %s517 = int_to_ptr.vmem [resolvable:$true] %s516
          %519 = dma.vmem_to_hbm [thread:$0]  %s517, 128, %s514, %s487
        $region40: #{tpu_custom_call.1} parent=31 // pred_fallthru
          _
      $region32: #{tpu_custom_call.1} parent=5 // pred_fallthru
        _
      %p520 = scmp.le.s32.totalorder 2, %s17
      // Predicated region
      $region41: #{tpu_custom_call.1} parent=5 // pred_check
        %p521 = pneg %p520
      $region42: #{tpu_custom_call.1} parent=5 // pred_check_branch
        %523 = sbr.rel (%p521) target = $region44
      $region43: #{tpu_custom_call.1} parent=5 // pred_region
        %s524 = ssub.s32 %s17, 2
        // Predicated region
        $region45: #{tpu_custom_call.1} parent=43 // pred_check
          %p525 = pneg %p114
        $region46: #{tpu_custom_call.1} parent=43 // pred_check_branch
          %527 = sbr.rel (%p525) target = $region48
        $region47: #{tpu_custom_call.1} parent=43 // pred_region
          %s528 = sand.u32 %s99, 1
          %s529 = scalar_lea.sflag [#allocation3], %s528
          %s530 = sand.u32 %s99, 1
          %s531 = smul.addr %s530, 32
          %s532 = scalar_lea.vmem [#allocation2], %s531
          %533 = dma.done %s529, 512
        $region48: #{tpu_custom_call.1} parent=43 // pred_fallthru
          _
        // Predicated region
        $region49: #{tpu_custom_call.1} parent=43 // pred_check
          %p534 = pneg %p140
        $region50: #{tpu_custom_call.1} parent=43 // pred_check_branch
          %536 = sbr.rel (%p534) target = $region52
        $region51: #{tpu_custom_call.1} parent=43 // pred_region
          %s537 = sand.u32 %s125, 1
          %s538 = scalar_lea.sflag [#allocation5], %s537
          %s539 = sand.u32 %s125, 1
          %s540 = smul.addr %s539, 8
          %s541 = scalar_lea.vmem [#allocation4], %s540
          %542 = dma.done %s538, 128
        $region52: #{tpu_custom_call.1} parent=43 // pred_fallthru
          _
      $region44: #{tpu_custom_call.1} parent=5 // pred_fallthru
        _
    $region6: #{tpu_custom_call.1} parent=1 // loop_footer
      %s21 = sadd.s32 1, %s17
    $region7: #{tpu_custom_call.1} parent=1 // loop_footer_branch
      %16 = sbr.rel target = $region3
    $region8: #{tpu_custom_call.1} parent=1 // loop_exit
      _
    %543 = vsyncpa [#allocation3], 1
    %s544 = scalar_lea.sflag [#allocation3], 1
    %545 = vsyncpa %s544, 1
    %546 = vsyncpa [#allocation5], 1
    %s547 = scalar_lea.sflag [#allocation5], 1
    %548 = vsyncpa %s547, 1

</llo_original>
